<compile_context>
chip_gen: v5e
topology: v5e:2x2
jax: 0.10.0
libtpu: 0.0.40
codegen_flags: <defaults>
</compile_context>

<pallas_src>
import functools

import jax
import jax.numpy as jnp
from jax import lax
from jax.experimental import pallas as pl
from jax.experimental.pallas import tpu as pltpu


def _cdiv(a, b):
    return -(-a // b)


def _round_up(v, m):
    return _cdiv(v, m) * m


def _channel_attn_kernel(w_ref, b_ref, x_ref, o_ref, *, cinp):
    # w_ref: SMEM (cinp,) f32   b_ref: SMEM (1,) f32   (scalar-prefetched)
    # x_ref: VMEM (cinp, rows_blk, lanes)   o_ref: VMEM (rows_blk, lanes)
    acc = x_ref[0].astype(jnp.float32) * w_ref[0]
    if cinp <= 32:
        # Unrolled VPU mul/add chain over the lane-dense (rows, lanes) slab.
        for c in range(1, cinp):
            acc = acc + x_ref[c].astype(jnp.float32) * w_ref[c]
    else:
        # Fallback for large cinp (not exercised by the demo).
        def body(c, a):
            return a + x_ref[c].astype(jnp.float32) * w_ref[c]
        acc = lax.fori_loop(1, cinp, body, acc)
    o_ref[...] = jax.nn.sigmoid(acc + b_ref[0]).astype(o_ref.dtype)


def channel_attention(x, weight, bias, cinp):
    """x: (B, C, H, W), NCHW, any float dtype (f32 matches torch exactly; bf16
    input halves HBM traffic and is upcast to f32 inside the kernel).
    weight: (1, cinp, 1) Conv1d weight; bias: (1,).
    Returns (B, L, 1, 1), L = C*H*W // cinp, matching channelAttention.forward."""
    B = x.shape[0]
    total = x.size
    assert total % (B * cinp) == 0, "C*H*W must be divisible by cinp (torch .view)"
    L = total // (B * cinp)
    P = B * L
    out_dtype = x.dtype
    itemsize = jnp.dtype(x.dtype).itemsize

    # torch .view on a contiguous NCHW tensor == row-major regroup to (P, cinp).
    # Transpose once in the wrapper so positions are lane-dense in the kernel.
    xt = x.reshape(P, cinp).T                                   # (cinp, P)

    # Lane/sublane-dense output slab: positions -> (rows, lanes).
    lanes = 1024 if P >= 8 * 1024 else _round_up(max(128, _cdiv(P, 8)), 128)
    rows = _cdiv(P, lanes)

    # Rows per grid step: target ~2 MiB of input per step (multiple of 8 sublanes).
    # (Very large cinp would want a different blocking; not the module's regime.)
    bytes_per_row = cinp * lanes * itemsize
    rows_for_2mib = max(8, ((2 * 1024 * 1024) // bytes_per_row) // 8 * 8)
    rows_blk = max(8, min(_round_up(rows, 8), rows_for_2mib))
    rows_pad = _round_up(rows, rows_blk)

    pad = rows_pad * lanes - P
    if pad:
        xt = jnp.pad(xt, ((0, 0), (0, pad)))                    # zeros; sliced off below
    xt = xt.reshape(cinp, rows_pad, lanes)

    w1d = weight.reshape(cinp).astype(jnp.float32)
    b1d = bias.reshape(1).astype(jnp.float32)

    grid = (rows_pad // rows_blk,)
    out2d = pl.pallas_call(
        functools.partial(_channel_attn_kernel, cinp=cinp),
        out_shape=jax.ShapeDtypeStruct((rows_pad, lanes), out_dtype),
        grid_spec=pltpu.PrefetchScalarGridSpec(
            num_scalar_prefetch=2,          # w, b -> SMEM scalars
            grid=grid,
            in_specs=[
                pl.BlockSpec((cinp, rows_blk, lanes), lambda r, w, b: (0, r, 0)),
            ],
            out_specs=pl.BlockSpec((rows_blk, lanes), lambda r, w, b: (r, 0)),
        ),
        compiler_params=pltpu.CompilerParams(
            dimension_semantics=("parallel",),     # row blocks shard across v7x cores
            vmem_limit_bytes=32 * 1024 * 1024,     # explicit; blocks use ~5 MiB 2x-buffered
        ),
    )(w1d, b1d, xt)

    out = out2d.reshape(rows_pad * lanes)[:P]
    return out.reshape(B, L, 1, 1)


if __name__ == "__main__":
    key = jax.random.PRNGKey(0)
    kx, kw, kb = jax.random.split(key, 3)

    B, C, H, W = 2, 4, 16, 16
    cinp = C                                   # channelAttention(cinp=C)
    x = jax.random.normal(kx, (B, C, H, W), dtype=jnp.float32)

    # Deterministic Conv1d(cinp, 1, 1) params: weight (1, cinp, 1), bias (1,)
    bound = 1.0 / (cinp ** 0.5)
    weight = jax.random.uniform(kw, (1, cinp, 1), minval=-bound, maxval=bound,
                                dtype=jnp.float32)
    bias = jax.random.uniform(kb, (1,), minval=-bound, maxval=bound,
                              dtype=jnp.float32)

    attn = channel_attention(x, weight, bias, cinp)
    attn = jax.block_until_ready(attn)

    # Pure-JAX reference mirroring the torch forward exactly.
    L = C * H * W // cinp
    xv = x.reshape(B, L, cinp)
    ref = jax.nn.sigmoid(jnp.einsum("blc,c->bl", xv, weight.reshape(cinp)) + bias[0])
    ref = ref.reshape(B, L, 1, 1)

    assert attn.shape == (B, L, 1, 1), attn.shape
    assert jnp.allclose(attn, ref, atol=1e-5, rtol=1e-5)
    print("KERNEL_OK")
</pallas_src>

<mosaic_0001>
module attributes {stable_mosaic.version = 11 : i64} {
  func.func @_channel_attn_kernel(%arg0: i32, %arg1: memref<4xf32, #tpu.memory_space<smem>>, %arg2: memref<1xf32, #tpu.memory_space<smem>>, %arg3: memref<4x8x128xf32, #tpu.memory_space<vmem>>, %arg4: memref<8x128xf32, #tpu.memory_space<vmem>>) attributes {dimension_semantics = [#tpu.dimension_semantics<parallel>], iteration_bounds = array<i64: 1>, scalar_prefetch = 2 : i64, scratch_operands = 0 : i64, tpu.core_type = #tpu.core_type<tc>, window_params = [{transform_indices = @transform_0, window_bounds = array<i64: 4, 8, 128>}, {transform_indices = @transform_1, window_bounds = array<i64: 8, 128>}]} {
    %c0 = arith.constant 0 : index
    %c0_0 = arith.constant 0 : index
    %c0_1 = arith.constant 0 : index
    %0 = vector.load %arg3[%c0, %c0_0, %c0_1] : memref<4x8x128xf32, #tpu.memory_space<vmem>>, vector<1x8x128xf32>
    %1 = vector.shape_cast %0 : vector<1x8x128xf32> to vector<8x128xf32>
    %c0_2 = arith.constant 0 : index
    %2 = memref.load %arg1[%c0_2] : memref<4xf32, #tpu.memory_space<smem>>
    %3 = vector.broadcast %2 : f32 to vector<8x128xf32>
    %4 = arith.mulf %1, %3 : vector<8x128xf32>
    %c1 = arith.constant 1 : index
    %c0_3 = arith.constant 0 : index
    %c0_4 = arith.constant 0 : index
    %5 = vector.load %arg3[%c1, %c0_3, %c0_4] : memref<4x8x128xf32, #tpu.memory_space<vmem>>, vector<1x8x128xf32>
    %6 = vector.shape_cast %5 : vector<1x8x128xf32> to vector<8x128xf32>
    %c1_5 = arith.constant 1 : index
    %7 = memref.load %arg1[%c1_5] : memref<4xf32, #tpu.memory_space<smem>>
    %8 = vector.broadcast %7 : f32 to vector<8x128xf32>
    %9 = arith.mulf %6, %8 : vector<8x128xf32>
    %10 = arith.addf %4, %9 : vector<8x128xf32>
    %c2 = arith.constant 2 : index
    %c0_6 = arith.constant 0 : index
    %c0_7 = arith.constant 0 : index
    %11 = vector.load %arg3[%c2, %c0_6, %c0_7] : memref<4x8x128xf32, #tpu.memory_space<vmem>>, vector<1x8x128xf32>
    %12 = vector.shape_cast %11 : vector<1x8x128xf32> to vector<8x128xf32>
    %c2_8 = arith.constant 2 : index
    %13 = memref.load %arg1[%c2_8] : memref<4xf32, #tpu.memory_space<smem>>
    %14 = vector.broadcast %13 : f32 to vector<8x128xf32>
    %15 = arith.mulf %12, %14 : vector<8x128xf32>
    %16 = arith.addf %10, %15 : vector<8x128xf32>
    %c3 = arith.constant 3 : index
    %c0_9 = arith.constant 0 : index
    %c0_10 = arith.constant 0 : index
    %17 = vector.load %arg3[%c3, %c0_9, %c0_10] : memref<4x8x128xf32, #tpu.memory_space<vmem>>, vector<1x8x128xf32>
    %18 = vector.shape_cast %17 : vector<1x8x128xf32> to vector<8x128xf32>
    %c3_11 = arith.constant 3 : index
    %19 = memref.load %arg1[%c3_11] : memref<4xf32, #tpu.memory_space<smem>>
    %20 = vector.broadcast %19 : f32 to vector<8x128xf32>
    %21 = arith.mulf %18, %20 : vector<8x128xf32>
    %22 = arith.addf %16, %21 : vector<8x128xf32>
    %c0_12 = arith.constant 0 : index
    %23 = memref.load %arg2[%c0_12] : memref<1xf32, #tpu.memory_space<smem>>
    %24 = vector.broadcast %23 : f32 to vector<8x128xf32>
    %25 = arith.addf %22, %24 : vector<8x128xf32>
    %26 = arith.negf %25 : vector<8x128xf32>
    %27 = math.exp %26 : vector<8x128xf32>
    %cst = arith.constant 1.000000e+00 : f32
    %28 = vector.broadcast %cst : f32 to vector<8x128xf32>
    %29 = arith.addf %28, %27 : vector<8x128xf32>
    %30 = arith.divf %28, %29 : vector<8x128xf32>
    %c0_13 = arith.constant 0 : index
    %c0_14 = arith.constant 0 : index
    %31 = vector.load %arg4[%c0_13, %c0_14] : memref<8x128xf32, #tpu.memory_space<vmem>>, vector<8x128xf32>
    tpu.vector_store %arg4[%c0_13, %c0_14], %30 {strides = array<i32>} : memref<8x128xf32, #tpu.memory_space<vmem>>, vector<8x128xf32>,
    return
  }
  func.func @transform_0(%arg0: i32, %arg1: memref<4xf32, #tpu.memory_space<smem>>, %arg2: memref<1xf32, #tpu.memory_space<smem>>) -> (i32, i32, i32) {
    %c0_i32 = arith.constant 0 : i32
    %c0_i32_0 = arith.constant 0 : i32
    %c0_i32_1 = arith.constant 0 : i32
    return %c0_i32, %arg0, %c0_i32_0 : i32, i32, i32
  }
  func.func @transform_1(%arg0: i32, %arg1: memref<4xf32, #tpu.memory_space<smem>>, %arg2: memref<1xf32, #tpu.memory_space<smem>>) -> (i32, i32) {
    %c0_i32 = arith.constant 0 : i32
    %c0_i32_0 = arith.constant 0 : i32
    return %arg0, %c0_i32 : i32, i32
  }
}

</mosaic_0001>

<llo_original>
// kernel: tpu_custom_call.1
$region0: #{tpu_custom_call.1}
  #allocation0 [shape = 'u32[]', space=smem, size = 0x4, offset = 0x4, fixed_abs, tag = 'smem constant byte address 0x4 - core index']
  #allocation1 [shape = 'u32[72,128]{1,0:T(1,128)}', space=vmem, size = 0x9000, scoped, tag = 'internal scratch']
  #allocation2 [shape = 's32[1]{0}', space=sflag, size = 0x4, scoped, tag = 'scoped memory for tpu_custom_call.1']
  #allocation3 [shape = 'u8[512]{0}', space=smem, size = 0x200, scoped, tag = 'prefetched SMEM operand 0']
  #allocation4 [shape = 'f32[1]{0:T(128)S(6)}', space=smem, size = 0x200, scoped, tag = 'prefetched SMEM operand 1']
  %s0 = inlined_call_operand.vmem [shape: f32[4], index: 0, kind: input, shape index: {}]
  %s1 = inlined_call_operand.<no memory space> [shape: f32[1], index: 1, kind: input, shape index: {}]
  %s2 = inlined_call_operand.hbm [shape: f32[4,8,128], index: 2, kind: input, shape index: {}]
  %s3 = inlined_call_operand.hbm [shape: f32[8,128], index: 3, kind: output, shape index: {}]
  %s4 = sld [smem:[#allocation0]]
  $region18: #{tpu_custom_call.1} parent=0
    _
  %s6 = ssub.s32 1, %s4
  %s7 = scalar_select 0, %s6, %s4
  %s9 = sshll.u32 %s0, 4
  %s10 = int_to_ptr.vmem [resolvable:$true] %s9
  %12 = dma.vmem_to_smem %s10, 16, [#allocation3], [#allocation2]
  %13 = sst [smem:[#allocation4]] %s1
  %15 = dma.done [#allocation2], 16
  %16 = sfence
  $region1: #{tpu_custom_call.1} parent=0
    #allocation5 [shape = 'u8[16384]{0}', space=vmem, size = 0x4000, scoped, tag = 'input window, operand 2, single buffered']
    #allocation6 [shape = 's32[1]{0}', space=sflag, size = 0x4, scoped, tag = 'scoped memory for tpu_custom_call.1']
    #allocation7 [shape = 's32[1]{0}', space=sflag, size = 0x4, scoped, tag = 'scoped memory for tpu_custom_call.1']
    #allocation8 [shape = 'u8[4096]{0}', space=vmem, size = 0x1000, scoped, tag = 'output window, operand 0, single buffered']
    %17 = vsyncpa [#allocation6], 0
    %18 = vsyncpa [#allocation7], 0
    // Predicated region
    $region2: #{tpu_custom_call.1} parent=1 // pred_check
      _
    $region3: #{tpu_custom_call.1} parent=1 // pred_check_branch
      %20 = sbr.rel (0) target = $region5
    $region4: #{tpu_custom_call.1} parent=1 // pred_region
      %22 = vsyncadd [#allocation6], 0
      %s23 = sshll.u32 %s2, 4
      %s24 = int_to_ptr.hbm [resolvable:$true] %s23
      %s25 = sshll.u32 [#allocation5], 4
      %s26 = int_to_ptr.vmem [resolvable:$true] %s25
      %31 = dma.hbm_to_vmem [thread:$0]  %s24, 512, %s26, [#allocation6], 128, 128, 8
    $region5: #{tpu_custom_call.1} parent=1 // pred_fallthru
      _
    // Predicated region
    $region6: #{tpu_custom_call.1} parent=1 // pred_check
      _
    $region7: #{tpu_custom_call.1} parent=1 // pred_check_branch
      %33 = sbr.rel (0) target = $region9
    $region8: #{tpu_custom_call.1} parent=1 // pred_region
      %35 = dma.done [#allocation6], 512
    $region9: #{tpu_custom_call.1} parent=1 // pred_fallthru
      _
    %v36 = vld [vmem:[#allocation5] sm:$0xff]
    %s37 = sld [smem:[#allocation3]]
    %v38 = vstv %s37
    %v39 = vmul.f32 %v36, %v38
    %s40 = scalar_lea.vmem [#allocation5], 8
    %v41 = vld [vmem:[%s40] sm:$0xff]
    %s42 = sld [smem:[#allocation3 + $0x1]]
    %v43 = vstv %s42
    %v44 = vmul.f32 %v41, %v43
    %v45 = vadd.f32 %v39, %v44
    %s46 = scalar_lea.vmem [#allocation5], 16
    %v47 = vld [vmem:[%s46] sm:$0xff]
    %s48 = sld [smem:[#allocation3 + $0x2]]
    %v49 = vstv %s48
    %v50 = vmul.f32 %v47, %v49
    %v51 = vadd.f32 %v45, %v50
    %s52 = scalar_lea.vmem [#allocation5], 24
    %v53 = vld [vmem:[%s52] sm:$0xff]
    %s54 = sld [smem:[#allocation3 + $0x3]]
    %v55 = vstv %s54
    %v56 = vmul.f32 %v53, %v55
    %v57 = vadd.f32 %v51, %v56
    %s58 = sld [smem:[#allocation4]]
    %v59 = vstv %s58
    %v60 = vadd.f32 %v57, %v59
    %v61 = vxor.u32 %v60, 2147483648
    %v62 = vmul.f32 %v61, 1.442695
    %v63 = vpow.pop %v62
    %v64 = vadd.f32 %v63, 1.0
    %v65 = vrcp.pop %v64
    %v66 = vmul.f32 %v64, %v65
    %v67 = vsub.f32 1.0, %v66
    %v68 = vmul.f32 %v65, %v67
    %v69 = vadd.f32 %v65, %v68
    %vm70 = vweird.f32 %v64
    %vm71 = vweird.f32 %v65
    %vm72 = vmor %vm70, %vm71
    %v73 = vsel %vm72, %v65, %v69
    %v74 = vand.u32 2147483647, %v64
    %vm75 = vcmp.eq.f32.partialorder %v74, 8.507059e+37
    %v76 = vand.u32 %v64, 2147483648
    %v77 = vor.u32 1.1754944e-38, %v76
    %v78 = vsel %vm75, %v77, %v73
    %v79 = vmul.f32 1.0, %v78
    %80 = vst [vmem:[#allocation8] sm:$0xff] %v79
    // Predicated region
    $region10: #{tpu_custom_call.1} parent=1 // pred_check
      _
    $region11: #{tpu_custom_call.1} parent=1 // pred_check_branch
      %82 = sbr.rel (0) target = $region13
    $region12: #{tpu_custom_call.1} parent=1 // pred_region
      %84 = vsyncadd [#allocation7], 0
      %s86 = sshll.u32 [#allocation8], 4
      %s87 = int_to_ptr.vmem [resolvable:$true] %s86
      %s88 = sshll.u32 %s3, 4
      %s89 = int_to_ptr.hbm [resolvable:$true] %s88
      %91 = dma.vmem_to_hbm [thread:$0]  %s87, 128, %s89, [#allocation7]
    $region13: #{tpu_custom_call.1} parent=1 // pred_fallthru
      _
    // Predicated region
    $region14: #{tpu_custom_call.1} parent=1 // pred_check
      _
    $region15: #{tpu_custom_call.1} parent=1 // pred_check_branch
      %93 = sbr.rel (0) target = $region17
    $region16: #{tpu_custom_call.1} parent=1 // pred_region
      %95 = dma.done [#allocation7], 128
    $region17: #{tpu_custom_call.1} parent=1 // pred_fallthru
      _
    %96 = vsyncpa [#allocation6], 1
    %97 = vsyncpa [#allocation7], 1

</llo_original>
